<compile_context>
chip_gen: v7x
topology: tpu7x:2x2x1
jax: 0.10.0
libtpu: 0.0.40
codegen_flags: <defaults>
</compile_context>

<pallas_src>
import functools

import jax
import jax.numpy as jnp
from jax.experimental import pallas as pl
from jax.experimental.pallas import tpu as pltpu


def _round_up(x, m):
    return ((x + m - 1) // m) * m


# --------------------------------------------------------------------------
# Kernel 1: attention + single-step LSTM (gridless)
# --------------------------------------------------------------------------
def attn_lstm_kernel(
    # activations
    emb_ref,       # (B, E)      f32
    h_ref,         # (B, H)      f32
    c_ref,         # (B, H)      f32
    enc_ref,       # (B, Sp, 2H) bf16 (zero padded along Sp)
    mask_add_ref,  # (B, Sp)     f32 additive mask (0 or -1e10; -1e10 on Sp pad)
    # attention params
    wa_h_ref,      # (H, H)      bf16
    wa_e_ref,      # (2H, H)     bf16
    ba_ref,        # (1, H)      f32
    v_ref,         # (1, H)      f32
    # lstm params
    wih_e_ref,     # (E, 4H)     bf16
    wih_c_ref,     # (2H, 4H)    bf16
    whh_ref,       # (H, 4H)     bf16
    blstm_ref,     # (1, 4H)     f32 (= b_ih + b_hh)
    # outputs
    hn_ref,        # (B, H)      f32   (aliases h_ref's HBM buffer)
    cn_ref,        # (B, H)      f32   (aliases c_ref's HBM buffer)
    feat_ref,      # (B, 3H+E)   bf16  (= [h_new, context, emb])
    *, hidden_size: int,
):
    H = hidden_size
    f32 = jnp.float32
    bf16 = jnp.bfloat16

    emb = emb_ref[...]
    h = h_ref[...]
    c = c_ref[...]
    enc = enc_ref[...]                                   # bf16
    B, Sp, E2 = enc.shape

    # ---------------- Attention ----------------
    # tanh(cat([h_rep, enc]) @ Wa^T + b) == tanh(h @ Wa_h + enc @ Wa_e + b)
    h_part = jnp.dot(h.astype(bf16), wa_h_ref[...],
                     preferred_element_type=f32)                           # (B, H)
    # Flatten the batched matmul into one MXU matmul with M = B*Sp (view: Sp % 8 == 0).
    enc_part = jnp.dot(enc.reshape(B * Sp, E2), wa_e_ref[...],
                       preferred_element_type=f32).reshape(B, Sp, H)       # (B, Sp, H)
    energy_pre = jnp.tanh(h_part[:, None, :] + enc_part + ba_ref[...][None, :, :])
    # energy = energy_pre @ v^T   (v has no bias)
    energy = jnp.sum(energy_pre * v_ref[...][None, :, :], axis=-1)         # (B, Sp)
    # masked_fill(padding_mask, -1e10) == additive -1e10 bias (also on Sp padding)
    energy = energy + mask_add_ref[...]

    # softmax over source positions (f32, EUP reciprocal)
    m = jnp.max(energy, axis=-1, keepdims=True)
    e = jnp.exp(energy - m)
    denom = jnp.sum(e, axis=-1, keepdims=True)
    attn = e * pl.reciprocal(denom, approx=True)                           # (B, Sp)

    # context = attn_weights.bmm(encoder_outputs)
    context = jnp.sum(attn[:, :, None] * enc.astype(f32), axis=1)          # (B, 2H)

    # ---------------- LSTM (single step, single layer) ----------------
    # Gate matmuls accumulate in registers (no VMEM scratch round-trips).
    gates = (jnp.dot(emb.astype(bf16), wih_e_ref[...], preferred_element_type=f32)
             + jnp.dot(context.astype(bf16), wih_c_ref[...], preferred_element_type=f32)
             + jnp.dot(h.astype(bf16), whh_ref[...], preferred_element_type=f32)
             + blstm_ref[...])                                             # (B, 4H)

    i_g = jax.nn.sigmoid(gates[:, 0 * H:1 * H])
    f_g = jax.nn.sigmoid(gates[:, 1 * H:2 * H])
    g_g = jnp.tanh(gates[:, 2 * H:3 * H])
    o_g = jax.nn.sigmoid(gates[:, 3 * H:4 * H])
    c_new = f_g * c + i_g * g_g
    h_new = o_g * jnp.tanh(c_new)                                          # (B, H)

    hn_ref[...] = h_new
    cn_ref[...] = c_new
    # Projection features in MXU order cat([rnn_output, context, embeddings]).
    feat_ref[...] = jnp.concatenate([h_new, context, emb], axis=-1).astype(bf16)


# --------------------------------------------------------------------------
# Kernel 2: fused output projection, tiled over the padded vocab
#   out_tile = features @ Wo_tile + bo_tile   (one matmul, one store)
# --------------------------------------------------------------------------
def out_proj_kernel(feat_ref, wo_ref, bo_ref, out_ref):
    out_ref[...] = (jnp.dot(feat_ref[...], wo_ref[...],
                            preferred_element_type=jnp.float32)
                    + bo_ref[...])


# --------------------------------------------------------------------------
# Param prep (one-time): bf16 weight streams, fused + contiguous vocab tiles
# --------------------------------------------------------------------------
def prepare_decoder_params(params):
    V = params["bo"].shape[-1]
    H = params["wa_h"].shape[0]
    E = params["wih_e"].shape[0]
    K = 3 * H + E                                         # [h | ctx | emb] rows

    # Vocab tile: as large as comfortably fits (2048 on 128 MiB VMEM chips,
    # 1024 on v7x's 64 MiB), but never bigger than the (128-rounded) vocab.
    try:
        vmem_cap = getattr(pltpu.get_tpu_info(), "vmem_capacity_bytes", 64 << 20)
    except Exception:
        vmem_cap = 64 << 20
    tv_target = 2048 if vmem_cap >= (100 << 20) else 1024
    TV = min(tv_target, _round_up(V, 128))
    Vp = _round_up(V, TV)
    nvb = Vp // TV
    pad = Vp - V

    def bf(x):
        return x.astype(jnp.bfloat16)

    # Fused projection weight [wo_h; wo_c; wo_e] -> (K, Vp), then pre-reshaped to
    # (nvb, K, TV) so each grid step DMAs one fully contiguous HBM tile.
    wo = jnp.concatenate([params["wo_h"], params["wo_c"], params["wo_e"]], axis=0)
    wo = jnp.pad(wo, ((0, 0), (0, pad)))
    wo3 = bf(wo).reshape(K, nvb, TV).transpose(1, 0, 2)   # (nvb, K, TV)
    bo3 = jnp.pad(params["bo"], ((0, 0), (0, pad))).reshape(nvb, 1, TV)

    return {
        "emb_table": params["emb_table"],                 # f32 (gather in JAX)
        "wa_h": bf(params["wa_h"]), "wa_e": bf(params["wa_e"]),
        "ba": params["ba"], "v": params["v"],             # biases / v stay f32
        "wih_e": bf(params["wih_e"]), "wih_c": bf(params["wih_c"]),
        "whh": bf(params["whh"]), "blstm": params["blstm"],
        "wo3": wo3, "bo3": bo3,
        "vocab_size": V, "vocab_padded": Vp, "vocab_tile": TV,
    }


# --------------------------------------------------------------------------
# Wrapper (mirrors Decoder.forward, eval mode)
# --------------------------------------------------------------------------
def decoder_forward(prepared, tgt_ids, last_hidden_cell_states, encoder_outputs,
                    padding_src_mask=None):
    h0, c0 = last_hidden_cell_states                      # each (1, B, H)
    B = tgt_ids.shape[0]
    H = h0.shape[-1]
    S = encoder_outputs.shape[1]
    E = prepared["emb_table"].shape[1]
    V = prepared["vocab_size"]
    Vp = prepared["vocab_padded"]
    TV = prepared["vocab_tile"]
    nvb = Vp // TV
    K = 3 * H + E

    # Glue: embedding gather + dropout(identity) stay in plain JAX.
    emb = prepared["emb_table"][tgt_ids[:, 0]].astype(jnp.float32)   # (B, E)
    h = h0[0]                                                        # (B, H)
    c = c0[0]                                                        # (B, H)

    if padding_src_mask is None:
        mask_add = jnp.zeros((B, S), jnp.float32)
    else:
        mask_add = padding_src_mask.astype(jnp.float32) * jnp.float32(-1e10)

    # Pad S to a multiple of 8: the in-kernel (B,Sp,2H)->(B*Sp,2H) reshape stays
    # a view (no VMEM relayout). Pads get zero enc rows and -1e10 mask bias.
    Sp = _round_up(S, 8)
    enc = encoder_outputs.astype(jnp.bfloat16)            # halve HBM traffic
    if Sp != S:
        enc = jnp.pad(enc, ((0, 0), (0, Sp - S), (0, 0)))
        mask_add = jnp.pad(mask_add, ((0, 0), (0, Sp - S)),
                           constant_values=jnp.float32(-1e10))

    vmem = pl.BlockSpec(memory_space=pltpu.MemorySpace.VMEM)
    kernel1 = functools.partial(attn_lstm_kernel, hidden_size=H)

    # ---------------- call 1: attention + LSTM ----------------
    h_new, c_new, features = pl.pallas_call(
        kernel1,
        out_shape=(
            jax.ShapeDtypeStruct((B, H), jnp.float32),
            jax.ShapeDtypeStruct((B, H), jnp.float32),
            jax.ShapeDtypeStruct((B, K), jnp.bfloat16),
        ),
        in_specs=[vmem] * 13,
        out_specs=(vmem, vmem, vmem),
        # Update the recurrent state in place (h -> h_new, c -> c_new).
        input_output_aliases={1: 0, 2: 1},
        compiler_params=pltpu.CompilerParams(vmem_limit_bytes=48 * 1024 * 1024),
    )(
        emb, h, c, enc, mask_add,
        prepared["wa_h"], prepared["wa_e"], prepared["ba"], prepared["v"],
        prepared["wih_e"], prepared["wih_c"], prepared["whh"], prepared["blstm"],
    )

    # ---------------- call 2: fused output projection, tiled over V ----------------
    # Right-size VMEM: double-buffered weight tile + outputs + resident activations.
    need = 2 * K * TV * 2 + 2 * B * TV * 4 + B * K * 2 + 2 * TV * 4 + (4 << 20)
    vmem2 = int(min(max(need, 16 << 20), 96 << 20))

    out_padded = pl.pallas_call(
        out_proj_kernel,
        out_shape=jax.ShapeDtypeStruct((B, Vp), jnp.float32),
        grid_spec=pltpu.PrefetchScalarGridSpec(
            num_scalar_prefetch=0,
            grid=(nvb,),
            in_specs=[
                pl.BlockSpec((B, K), lambda j: (0, 0)),            # features (resident)
                pl.BlockSpec((None, K, TV), lambda j: (j, 0, 0)),  # contiguous weight tile
                pl.BlockSpec((None, 1, TV), lambda j: (j, 0, 0)),  # bias tile
            ],
            out_specs=pl.BlockSpec((B, TV), lambda j: (0, j)),
        ),
        compiler_params=pltpu.CompilerParams(
            dimension_semantics=("parallel",),   # V tiles split across TCs on v7x
            vmem_limit_bytes=vmem2,
        ),
    )(features, prepared["wo3"], prepared["bo3"])

    out_proj = out_padded[:, :V]                           # drop the vocab padding
    return out_proj, (h_new[None, :, :], c_new[None, :, :])


def init_params(key, vocab_size, embedding_size, hidden_size):
    """Deterministic synthetic parameters (shapes match the torch module)."""
    V, E, H = vocab_size, embedding_size, hidden_size
    ks = jax.random.split(key, 12)

    def rnd(k, shape, scale=0.1):
        return (scale * jax.random.normal(k, shape)).astype(jnp.float32)

    return {
        # Embedding(V, E)
        "emb_table": rnd(ks[0], (V, E), 1.0),
        # Attention: Linear(3H -> H) split along cat([h, enc]); stored (in, out)
        "wa_h": rnd(ks[1], (H, H)),
        "wa_e": rnd(ks[2], (2 * H, H)),
        "ba": rnd(ks[3], (1, H)),
        # v_transform: Linear(H -> 1, bias=False)
        "v": rnd(ks[4], (1, H)),
        # LSTM(E + 2H -> H): W_ih split along cat([emb, context]); stored (in, out)
        "wih_e": rnd(ks[5], (E, 4 * H)),
        "wih_c": rnd(ks[6], (2 * H, 4 * H)),
        "whh": rnd(ks[7], (H, 4 * H)),
        "blstm": rnd(ks[8], (1, 4 * H)),   # b_ih + b_hh combined
        # out_transform: Linear(H + 2H + E -> V) split along cat([h, ctx, emb])
        "wo_h": rnd(ks[9], (H, V)),
        "wo_c": rnd(ks[10], (2 * H, V)),
        "wo_e": rnd(ks[11], (E, V)),
        "bo": jnp.zeros((1, V), jnp.float32),
    }


if __name__ == "__main__":
    # Small shapes consistent with the module.
    B, S, H, E, V = 2, 8, 32, 32, 64

    key = jax.random.PRNGKey(0)
    kp, k1, k2, k3, k4 = jax.random.split(key, 5)

    params = init_params(kp, V, E, H)
    prepared = prepare_decoder_params(params)

    tgt_ids = jax.random.randint(k1, (B, 1), 0, V, dtype=jnp.int32)
    h0 = (0.1 * jax.random.normal(k2, (1, B, H))).astype(jnp.float32)
    c0 = (0.1 * jax.random.normal(k3, (1, B, H))).astype(jnp.float32)
    encoder_outputs = (0.1 * jax.random.normal(k4, (B, S, 2 * H))).astype(jnp.float32)
    # padding mask: last two source positions of batch 0 are padding
    padding_src_mask = jnp.zeros((B, S), jnp.bool_).at[0, S - 2:].set(True)

    out_proj, (h_new, c_new) = decoder_forward(
        prepared, tgt_ids, (h0, c0), encoder_outputs, padding_src_mask
    )
    jax.block_until_ready((out_proj, h_new, c_new))

    assert out_proj.shape == (B, V)
    assert h_new.shape == (1, B, H) and c_new.shape == (1, B, H)
    assert bool(jnp.all(jnp.isfinite(out_proj)))
    assert bool(jnp.all(jnp.isfinite(h_new))) and bool(jnp.all(jnp.isfinite(c_new)))
    print("KERNEL_OK")
</pallas_src>

<mosaic_0001>
module attributes {stable_mosaic.version = 11 : i64} {
  func.func @attn_lstm_kernel(%arg0: memref<2x32xf32, #tpu.memory_space<vmem>>, %arg1: memref<2x32xf32, #tpu.memory_space<vmem>>, %arg2: memref<2x32xf32, #tpu.memory_space<vmem>>, %arg3: memref<2x8x64xbf16, #tpu.memory_space<vmem>>, %arg4: memref<2x8xf32, #tpu.memory_space<vmem>>, %arg5: memref<32x32xbf16, #tpu.memory_space<vmem>>, %arg6: memref<64x32xbf16, #tpu.memory_space<vmem>>, %arg7: memref<1x32xf32, #tpu.memory_space<vmem>>, %arg8: memref<1x32xf32, #tpu.memory_space<vmem>>, %arg9: memref<32x128xbf16, #tpu.memory_space<vmem>>, %arg10: memref<64x128xbf16, #tpu.memory_space<vmem>>, %arg11: memref<32x128xbf16, #tpu.memory_space<vmem>>, %arg12: memref<1x128xf32, #tpu.memory_space<vmem>>, %arg13: memref<2x32xf32, #tpu.memory_space<vmem>>, %arg14: memref<2x32xf32, #tpu.memory_space<vmem>>, %arg15: memref<2x128xbf16, #tpu.memory_space<vmem>>) attributes {dimension_semantics = [], scalar_prefetch = 0 : i64, scratch_operands = 0 : i64, tpu.core_type = #tpu.core_type<tc>} {
    %c0 = arith.constant 0 : index
    %c0_0 = arith.constant 0 : index
    %0 = vector.load %arg0[%c0, %c0_0] : memref<2x32xf32, #tpu.memory_space<vmem>>, vector<2x32xf32>
    %c0_1 = arith.constant 0 : index
    %c0_2 = arith.constant 0 : index
    %1 = vector.load %arg1[%c0_1, %c0_2] : memref<2x32xf32, #tpu.memory_space<vmem>>, vector<2x32xf32>
    %c0_3 = arith.constant 0 : index
    %c0_4 = arith.constant 0 : index
    %2 = vector.load %arg2[%c0_3, %c0_4] : memref<2x32xf32, #tpu.memory_space<vmem>>, vector<2x32xf32>
    %c0_5 = arith.constant 0 : index
    %c0_6 = arith.constant 0 : index
    %c0_7 = arith.constant 0 : index
    %3 = vector.load %arg3[%c0_5, %c0_6, %c0_7] : memref<2x8x64xbf16, #tpu.memory_space<vmem>>, vector<2x8x64xbf16>
    %4 = arith.truncf %1 : vector<2x32xf32> to vector<2x32xbf16>
    %c0_8 = arith.constant 0 : index
    %c0_9 = arith.constant 0 : index
    %5 = vector.load %arg5[%c0_8, %c0_9] : memref<32x32xbf16, #tpu.memory_space<vmem>>, vector<32x32xbf16>
    %cst = arith.constant dense<0.000000e+00> : vector<2x32xf32>
    %6 = tpu.matmul %4, %5, %cst {dimension_numbers = #tpu.dot_dimension_numbers<[1], [0], [0], [1], [0, 0, 1, 1], [], []>} : vector<2x32xbf16>, vector<32x32xbf16>, vector<2x32xf32> -> vector<2x32xf32>
    %7 = vector.shape_cast %3 : vector<2x8x64xbf16> to vector<16x64xbf16>
    %c0_10 = arith.constant 0 : index
    %c0_11 = arith.constant 0 : index
    %8 = vector.load %arg6[%c0_10, %c0_11] : memref<64x32xbf16, #tpu.memory_space<vmem>>, vector<64x32xbf16>
    %cst_12 = arith.constant dense<0.000000e+00> : vector<16x32xf32>
    %9 = tpu.matmul %7, %8, %cst_12 {dimension_numbers = #tpu.dot_dimension_numbers<[1], [0], [0], [1], [0, 0, 1, 1], [], []>} : vector<16x64xbf16>, vector<64x32xbf16>, vector<16x32xf32> -> vector<16x32xf32>
    %10 = vector.shape_cast %9 : vector<16x32xf32> to vector<2x8x32xf32>
    %11 = vector.shape_cast %6 : vector<2x32xf32> to vector<2x1x32xf32>
    %12 = vector.broadcast %11 : vector<2x1x32xf32> to vector<2x8x32xf32>
    %13 = arith.addf %12, %10 : vector<2x8x32xf32>
    %c0_13 = arith.constant 0 : index
    %c0_14 = arith.constant 0 : index
    %14 = vector.load %arg7[%c0_13, %c0_14] : memref<1x32xf32, #tpu.memory_space<vmem>>, vector<1x32xf32>
    %15 = vector.shape_cast %14 : vector<1x32xf32> to vector<1x1x32xf32>
    %16 = vector.broadcast %15 : vector<1x1x32xf32> to vector<2x8x32xf32>
    %17 = arith.addf %13, %16 : vector<2x8x32xf32>
    %18 = math.tanh %17 : vector<2x8x32xf32>
    %c0_15 = arith.constant 0 : index
    %c0_16 = arith.constant 0 : index
    %19 = vector.load %arg8[%c0_15, %c0_16] : memref<1x32xf32, #tpu.memory_space<vmem>>, vector<1x32xf32>
    %20 = vector.shape_cast %19 : vector<1x32xf32> to vector<1x1x32xf32>
    %21 = vector.broadcast %20 : vector<1x1x32xf32> to vector<2x8x32xf32>
    %22 = arith.mulf %18, %21 : vector<2x8x32xf32>
    %cst_17 = arith.constant dense<0.000000e+00> : vector<2x8xf32>
    %23 = vector.multi_reduction <add>, %22, %cst_17 [2] : vector<2x8x32xf32> to vector<2x8xf32>
    %c0_18 = arith.constant 0 : index
    %c0_19 = arith.constant 0 : index
    %24 = vector.load %arg4[%c0_18, %c0_19] : memref<2x8xf32, #tpu.memory_space<vmem>>, vector<2x8xf32>
    %25 = arith.addf %23, %24 : vector<2x8xf32>
    %cst_20 = arith.constant dense<0xFF800000> : vector<2xf32>
    %26 = vector.multi_reduction <maximumf>, %25, %cst_20 [1] : vector<2x8xf32> to vector<2xf32>
    %27 = vector.shape_cast %26 : vector<2xf32> to vector<2x1xf32>
    %28 = vector.broadcast %27 : vector<2x1xf32> to vector<2x8xf32>
    %29 = arith.subf %25, %28 : vector<2x8xf32>
    %30 = math.exp %29 : vector<2x8xf32>
    %cst_21 = arith.constant dense<0.000000e+00> : vector<2xf32>
    %31 = vector.multi_reduction <add>, %30, %cst_21 [1] : vector<2x8xf32> to vector<2xf32>
    %32 = vector.shape_cast %31 : vector<2xf32> to vector<2x1xf32>
    %33 = tpu.reciprocal %32 {approx = true} : vector<2x1xf32> -> vector<2x1xf32>
    %34 = vector.broadcast %33 : vector<2x1xf32> to vector<2x8xf32>
    %35 = arith.mulf %30, %34 : vector<2x8xf32>
    %36 = vector.shape_cast %35 : vector<2x8xf32> to vector<2x8x1xf32>
    %37 = arith.extf %3 : vector<2x8x64xbf16> to vector<2x8x64xf32>
    %38 = vector.broadcast %36 : vector<2x8x1xf32> to vector<2x8x64xf32>
    %39 = arith.mulf %38, %37 : vector<2x8x64xf32>
    %cst_22 = arith.constant dense<0.000000e+00> : vector<2x64xf32>
    %40 = vector.multi_reduction <add>, %39, %cst_22 [1] : vector<2x8x64xf32> to vector<2x64xf32>
    %41 = arith.truncf %0 : vector<2x32xf32> to vector<2x32xbf16>
    %c0_23 = arith.constant 0 : index
    %c0_24 = arith.constant 0 : index
    %42 = vector.load %arg9[%c0_23, %c0_24] : memref<32x128xbf16, #tpu.memory_space<vmem>>, vector<32x128xbf16>
    %cst_25 = arith.constant dense<0.000000e+00> : vector<2x128xf32>
    %43 = tpu.matmul %41, %42, %cst_25 {dimension_numbers = #tpu.dot_dimension_numbers<[1], [0], [0], [1], [0, 0, 1, 1], [], []>} : vector<2x32xbf16>, vector<32x128xbf16>, vector<2x128xf32> -> vector<2x128xf32>
    %44 = arith.truncf %40 : vector<2x64xf32> to vector<2x64xbf16>
    %c0_26 = arith.constant 0 : index
    %c0_27 = arith.constant 0 : index
    %45 = vector.load %arg10[%c0_26, %c0_27] : memref<64x128xbf16, #tpu.memory_space<vmem>>, vector<64x128xbf16>
    %cst_28 = arith.constant dense<0.000000e+00> : vector<2x128xf32>
    %46 = tpu.matmul %44, %45, %cst_28 {dimension_numbers = #tpu.dot_dimension_numbers<[1], [0], [0], [1], [0, 0, 1, 1], [], []>} : vector<2x64xbf16>, vector<64x128xbf16>, vector<2x128xf32> -> vector<2x128xf32>
    %47 = arith.addf %43, %46 : vector<2x128xf32>
    %48 = arith.truncf %1 : vector<2x32xf32> to vector<2x32xbf16>
    %c0_29 = arith.constant 0 : index
    %c0_30 = arith.constant 0 : index
    %49 = vector.load %arg11[%c0_29, %c0_30] : memref<32x128xbf16, #tpu.memory_space<vmem>>, vector<32x128xbf16>
    %cst_31 = arith.constant dense<0.000000e+00> : vector<2x128xf32>
    %50 = tpu.matmul %48, %49, %cst_31 {dimension_numbers = #tpu.dot_dimension_numbers<[1], [0], [0], [1], [0, 0, 1, 1], [], []>} : vector<2x32xbf16>, vector<32x128xbf16>, vector<2x128xf32> -> vector<2x128xf32>
    %51 = arith.addf %47, %50 : vector<2x128xf32>
    %c0_32 = arith.constant 0 : index
    %c0_33 = arith.constant 0 : index
    %52 = vector.load %arg12[%c0_32, %c0_33] : memref<1x128xf32, #tpu.memory_space<vmem>>, vector<1x128xf32>
    %53 = vector.broadcast %52 : vector<1x128xf32> to vector<2x128xf32>
    %54 = arith.addf %51, %53 : vector<2x128xf32>
    %55 = vector.extract_strided_slice %54 {offsets = [0, 0], sizes = [2, 32], strides = [1, 1]} : vector<2x128xf32> to vector<2x32xf32>
    %56 = arith.negf %55 : vector<2x32xf32>
    %57 = math.exp %56 : vector<2x32xf32>
    %cst_34 = arith.constant 1.000000e+00 : f32
    %58 = vector.broadcast %cst_34 : f32 to vector<2x32xf32>
    %59 = arith.addf %58, %57 : vector<2x32xf32>
    %60 = arith.divf %58, %59 : vector<2x32xf32>
    %61 = vector.extract_strided_slice %54 {offsets = [0, 32], sizes = [2, 32], strides = [1, 1]} : vector<2x128xf32> to vector<2x32xf32>
    %62 = arith.negf %61 : vector<2x32xf32>
    %63 = math.exp %62 : vector<2x32xf32>
    %cst_35 = arith.constant 1.000000e+00 : f32
    %64 = vector.broadcast %cst_35 : f32 to vector<2x32xf32>
    %65 = arith.addf %64, %63 : vector<2x32xf32>
    %66 = arith.divf %64, %65 : vector<2x32xf32>
    %67 = vector.extract_strided_slice %54 {offsets = [0, 64], sizes = [2, 32], strides = [1, 1]} : vector<2x128xf32> to vector<2x32xf32>
    %68 = math.tanh %67 : vector<2x32xf32>
    %69 = vector.extract_strided_slice %54 {offsets = [0, 96], sizes = [2, 32], strides = [1, 1]} : vector<2x128xf32> to vector<2x32xf32>
    %70 = arith.negf %69 : vector<2x32xf32>
    %71 = math.exp %70 : vector<2x32xf32>
    %cst_36 = arith.constant 1.000000e+00 : f32
    %72 = vector.broadcast %cst_36 : f32 to vector<2x32xf32>
    %73 = arith.addf %72, %71 : vector<2x32xf32>
    %74 = arith.divf %72, %73 : vector<2x32xf32>
    %75 = arith.mulf %66, %2 : vector<2x32xf32>
    %76 = arith.mulf %60, %68 : vector<2x32xf32>
    %77 = arith.addf %75, %76 : vector<2x32xf32>
    %78 = math.tanh %77 : vector<2x32xf32>
    %79 = arith.mulf %74, %78 : vector<2x32xf32>
    %c0_37 = arith.constant 0 : index
    %c0_38 = arith.constant 0 : index
    %80 = vector.load %arg13[%c0_37, %c0_38] : memref<2x32xf32, #tpu.memory_space<vmem>>, vector<2x32xf32>
    tpu.vector_store %arg13[%c0_37, %c0_38], %79 {strides = array<i32>} : memref<2x32xf32, #tpu.memory_space<vmem>>, vector<2x32xf32>,
    %c0_39 = arith.constant 0 : index
    %c0_40 = arith.constant 0 : index
    %81 = vector.load %arg14[%c0_39, %c0_40] : memref<2x32xf32, #tpu.memory_space<vmem>>, vector<2x32xf32>
    tpu.vector_store %arg14[%c0_39, %c0_40], %77 {strides = array<i32>} : memref<2x32xf32, #tpu.memory_space<vmem>>, vector<2x32xf32>,
    %82 = tpu.concatenate %79, %40, %0 in 1 : vector<2x32xf32>, vector<2x64xf32>, vector<2x32xf32> -> vector<2x128xf32>
    %83 = arith.truncf %82 : vector<2x128xf32> to vector<2x128xbf16>
    %c0_41 = arith.constant 0 : index
    %c0_42 = arith.constant 0 : index
    %84 = vector.load %arg15[%c0_41, %c0_42] : memref<2x128xbf16, #tpu.memory_space<vmem>>, vector<2x128xbf16>
    tpu.vector_store %arg15[%c0_41, %c0_42], %83 {strides = array<i32>} : memref<2x128xbf16, #tpu.memory_space<vmem>>, vector<2x128xbf16>,
    return
  }
}

</mosaic_0001>

<llo_original>
// kernel: tpu_custom_call.1
$region0: #{tpu_custom_call.1}
  #allocation0 [shape = 'u32[]', space=smem, size = 0x4, offset = 0x4, fixed_abs, tag = 'smem constant byte address 0x4 - core index']
  #allocation1 [shape = 'u32[144,128]{1,0:T(1,128)}', space=vmem, size = 0x12000, scoped, tag = 'internal scratch']
  %s0 = inlined_call_operand.vmem [shape: f32[2,32], index: 0, kind: input, shape index: {}]
  %s1 = inlined_call_operand.hbm [shape: f32[2,32], index: 1, kind: input, shape index: {}, may-alias: {1,13}]
  %s2 = inlined_call_operand.hbm [shape: f32[2,32], index: 2, kind: input, shape index: {}, may-alias: {2,14}]
  %s3 = inlined_call_operand.vmem [shape: bf16[2,8,64], index: 3, kind: input, shape index: {}]
  %s4 = inlined_call_operand.vmem [shape: f32[2,8], index: 4, kind: input, shape index: {}]
  %s5 = inlined_call_operand.vmem [shape: bf16[32,32], index: 5, kind: input, shape index: {}]
  %s6 = inlined_call_operand.vmem [shape: bf16[64,32], index: 6, kind: input, shape index: {}]
  %s7 = inlined_call_operand.hbm [shape: f32[1,32], index: 7, kind: input, shape index: {}]
  %s8 = inlined_call_operand.hbm [shape: f32[1,32], index: 8, kind: input, shape index: {}]
  %s9 = inlined_call_operand.hbm [shape: bf16[32,128], index: 9, kind: input, shape index: {}]
  %s10 = inlined_call_operand.vmem [shape: bf16[64,128], index: 10, kind: input, shape index: {}]
  %s11 = inlined_call_operand.hbm [shape: bf16[32,128], index: 11, kind: input, shape index: {}]
  %s12 = inlined_call_operand.hbm [shape: f32[1,128], index: 12, kind: input, shape index: {}]
  %s13 = inlined_call_operand.hbm [shape: f32[2,32], index: 13, kind: output, shape index: {0}, may-alias: {1,13}]
  %s14 = inlined_call_operand.hbm [shape: f32[2,32], index: 14, kind: output, shape index: {1}, may-alias: {2,14}]
  %s15 = inlined_call_operand.hbm [shape: bf16[2,128], index: 15, kind: output, shape index: {2}]
  %16 = xla_tuple %s13, %s14, %s15
  %s17 = sld [smem:[#allocation0]]
  $region106: #{tpu_custom_call.1} parent=0
    _
  %s19 = ssub.s32 1, %s17
  %s20 = scalar_select 0, %s19, %s17
  $region1: #{tpu_custom_call.1} parent=0
    #allocation2 [shape = 'u8[1024]{0}', space=vmem, size = 0x400, scoped, tag = 'input window, operand 1, single buffered']
    #allocation3 [shape = 's32[1]{0}', space=sflag, size = 0x4, scoped, tag = 'scoped memory for tpu_custom_call.1']
    #allocation4 [shape = 's32[1]{0}', space=sflag, size = 0x4, scoped, tag = 'scoped memory for tpu_custom_call.1']
    #allocation5 [shape = 'u8[1024]{0}', space=vmem, size = 0x400, scoped, tag = 'input window, operand 2, single buffered']
    #allocation6 [shape = 's32[1]{0}', space=sflag, size = 0x4, scoped, tag = 'scoped memory for tpu_custom_call.1']
    #allocation7 [shape = 'u8[512]{0}', space=vmem, size = 0x400, scoped, tag = 'input window, operand 7, single buffered']
    #allocation8 [shape = 'u8[512]{0}', space=vmem, size = 0x400, scoped, tag = 'input window, operand 8, single buffered']
    #allocation9 [shape = 's32[1]{0}', space=sflag, size = 0x4, scoped, tag = 'scoped memory for tpu_custom_call.1']
    #allocation10 [shape = 'u8[8192]{0}', space=vmem, size = 0x2000, scoped, tag = 'input window, operand 9, single buffered']
    #allocation11 [shape = 'u8[8192]{0}', space=vmem, size = 0x2000, scoped, tag = 'input window, operand 11, single buffered']
    #allocation12 [shape = 's32[1]{0}', space=sflag, size = 0x4, scoped, tag = 'scoped memory for tpu_custom_call.1']
    #allocation13 [shape = 'u8[512]{0}', space=vmem, size = 0x400, scoped, tag = 'input window, operand 12, single buffered']
    #allocation14 [shape = 'u8[1024]{0}', space=vmem, size = 0x400, scoped, tag = 'output window, operand 0, single buffered']
    #allocation15 [shape = 'u8[1024]{0}', space=vmem, size = 0x400, scoped, tag = 'output window, operand 1, single buffered']
    #allocation16 [shape = 's32[1]{0}', space=sflag, size = 0x4, scoped, tag = 'scoped memory for tpu_custom_call.1']
    #allocation17 [shape = 'u8[512]{0}', space=vmem, size = 0x400, scoped, tag = 'output window, operand 2, single buffered']
    %21 = vsyncpa [#allocation3], 0
    %22 = vsyncpa [#allocation6], 0
    %23 = vsyncpa [#allocation9], 0
    %24 = vsyncpa [#allocation12], 0
    %25 = vsyncpa [#allocation4], 0
    %26 = vsyncpa [#allocation16], 0
    // Predicated region
    $region2: #{tpu_custom_call.1} parent=1 // pred_check
      _
    $region3: #{tpu_custom_call.1} parent=1 // pred_check_branch
      %28 = sbr.rel (0) target = $region5
    $region4: #{tpu_custom_call.1} parent=1 // pred_region
      _
    $region5: #{tpu_custom_call.1} parent=1 // pred_fallthru
      _
    // Predicated region
    $region6: #{tpu_custom_call.1} parent=1 // pred_check
      _
    $region7: #{tpu_custom_call.1} parent=1 // pred_check_branch
      %30 = sbr.rel (0) target = $region9
    $region8: #{tpu_custom_call.1} parent=1 // pred_region
      %s32 = ssub.s32 32, 32
      %33 = vsyncadd [#allocation3], %s32
      %s35 = sshll.u32 [#allocation2], 4
      %s36 = int_to_ptr.vmem [resolvable:$true] %s35
      %38 = dma.hbm_to_vmem [thread:$0]  %s1, 32, %s36, [#allocation3]
    $region9: #{tpu_custom_call.1} parent=1 // pred_fallthru
      _
    // Predicated region
    $region10: #{tpu_custom_call.1} parent=1 // pred_check
      _
    $region11: #{tpu_custom_call.1} parent=1 // pred_check_branch
      %40 = sbr.rel (0) target = $region13
    $region12: #{tpu_custom_call.1} parent=1 // pred_region
      %s42 = ssub.s32 32, 32
      %43 = vsyncadd [#allocation6], %s42
      %s45 = sshll.u32 [#allocation5], 4
      %s46 = int_to_ptr.vmem [resolvable:$true] %s45
      %48 = dma.hbm_to_vmem [thread:$0]  %s2, 32, %s46, [#allocation6]
    $region13: #{tpu_custom_call.1} parent=1 // pred_fallthru
      _
    // Predicated region
    $region14: #{tpu_custom_call.1} parent=1 // pred_check
      _
    $region15: #{tpu_custom_call.1} parent=1 // pred_check_branch
      %50 = sbr.rel (0) target = $region17
    $region16: #{tpu_custom_call.1} parent=1 // pred_region
      _
    $region17: #{tpu_custom_call.1} parent=1 // pred_fallthru
      _
    // Predicated region
    $region18: #{tpu_custom_call.1} parent=1 // pred_check
      _
    $region19: #{tpu_custom_call.1} parent=1 // pred_check_branch
      %52 = sbr.rel (0) target = $region21
    $region20: #{tpu_custom_call.1} parent=1 // pred_region
      _
    $region21: #{tpu_custom_call.1} parent=1 // pred_fallthru
      _
    // Predicated region
    $region22: #{tpu_custom_call.1} parent=1 // pred_check
      _
    $region23: #{tpu_custom_call.1} parent=1 // pred_check_branch
      %54 = sbr.rel (0) target = $region25
    $region24: #{tpu_custom_call.1} parent=1 // pred_region
      _
    $region25: #{tpu_custom_call.1} parent=1 // pred_fallthru
      _
    // Predicated region
    $region26: #{tpu_custom_call.1} parent=1 // pred_check
      _
    $region27: #{tpu_custom_call.1} parent=1 // pred_check_branch
      %56 = sbr.rel (0) target = $region29
    $region28: #{tpu_custom_call.1} parent=1 // pred_region
      _
    $region29: #{tpu_custom_call.1} parent=1 // pred_fallthru
      _
    // Predicated region
    $region30: #{tpu_custom_call.1} parent=1 // pred_check
      _
    $region31: #{tpu_custom_call.1} parent=1 // pred_check_branch
      %58 = sbr.rel (0) target = $region33
    $region32: #{tpu_custom_call.1} parent=1 // pred_region
      %s60 = ssub.s32 16, 16
      %61 = vsyncadd [#allocation6], %s60
      %s63 = sshll.u32 [#allocation7], 4
      %s64 = int_to_ptr.vmem [resolvable:$true] %s63
      %66 = dma.hbm_to_vmem [thread:$0]  %s7, 16, %s64, [#allocation6]
    $region33: #{tpu_custom_call.1} parent=1 // pred_fallthru
      _
    // Predicated region
    $region34: #{tpu_custom_call.1} parent=1 // pred_check
      _
    $region35: #{tpu_custom_call.1} parent=1 // pred_check_branch
      %68 = sbr.rel (0) target = $region37
    $region36: #{tpu_custom_call.1} parent=1 // pred_region
      %s70 = ssub.s32 16, 16
      %71 = vsyncadd [#allocation9], %s70
      %s73 = sshll.u32 [#allocation8], 4
      %s74 = int_to_ptr.vmem [resolvable:$true] %s73
      %76 = dma.hbm_to_vmem [thread:$0]  %s8, 16, %s74, [#allocation9]
    $region37: #{tpu_custom_call.1} parent=1 // pred_fallthru
      _
    // Predicated region
    $region38: #{tpu_custom_call.1} parent=1 // pred_check
      _
    $region39: #{tpu_custom_call.1} parent=1 // pred_check_branch
      %78 = sbr.rel (0) target = $region41
    $region40: #{tpu_custom_call.1} parent=1 // pred_region
      %s80 = ssub.s32 256, 256
      %81 = vsyncadd [#allocation9], %s80
      %s82 = sshll.u32 [#allocation10], 4
      %s83 = int_to_ptr.vmem [resolvable:$true] %s82
      %88 = dma.hbm_to_vmem [thread:$0]  %s9, 256, %s83, [#allocation9], 64, 64, 4
    $region41: #{tpu_custom_call.1} parent=1 // pred_fallthru
      _
    // Predicated region
    $region42: #{tpu_custom_call.1} parent=1 // pred_check
      _
    $region43: #{tpu_custom_call.1} parent=1 // pred_check_branch
      %90 = sbr.rel (0) target = $region45
    $region44: #{tpu_custom_call.1} parent=1 // pred_region
      _
    $region45: #{tpu_custom_call.1} parent=1 // pred_fallthru
      _
    // Predicated region
    $region46: #{tpu_custom_call.1} parent=1 // pred_check
      _
    $region47: #{tpu_custom_call.1} parent=1 // pred_check_branch
      %92 = sbr.rel (0) target = $region49
    $region48: #{tpu_custom_call.1} parent=1 // pred_region
      %s94 = ssub.s32 256, 256
      %95 = vsyncadd [#allocation12], %s94
      %s96 = sshll.u32 [#allocation11], 4
      %s97 = int_to_ptr.vmem [resolvable:$true] %s96
      %102 = dma.hbm_to_vmem [thread:$0]  %s11, 256, %s97, [#allocation12], 64, 64, 4
    $region49: #{tpu_custom_call.1} parent=1 // pred_fallthru
      _
    // Predicated region
    $region50: #{tpu_custom_call.1} parent=1 // pred_check
      _
    $region51: #{tpu_custom_call.1} parent=1 // pred_check_branch
      %104 = sbr.rel (0) target = $region53
    $region52: #{tpu_custom_call.1} parent=1 // pred_region
      %s106 = ssub.s32 16, 16
      %107 = vsyncadd [#allocation12], %s106
      %s109 = sshll.u32 [#allocation13], 4
      %s110 = int_to_ptr.vmem [resolvable:$true] %s109
      %112 = dma.hbm_to_vmem [thread:$0]  %s12, 16, %s110, [#allocation12]
    $region53: #{tpu_custom_call.1} parent=1 // pred_fallthru
      _
    // Predicated region
    $region54: #{tpu_custom_call.1} parent=1 // pred_check
      _
    $region55: #{tpu_custom_call.1} parent=1 // pred_check_branch
      %114 = sbr.rel (0) target = $region57
    $region56: #{tpu_custom_call.1} parent=1 // pred_region
      %115 = dma.done [#allocation3], 32
    $region57: #{tpu_custom_call.1} parent=1 // pred_fallthru
      _
    // Predicated region
    $region58: #{tpu_custom_call.1} parent=1 // pred_check
      _
    $region59: #{tpu_custom_call.1} parent=1 // pred_check_branch
      %117 = sbr.rel (0) target = $region61
    $region60: #{tpu_custom_call.1} parent=1 // pred_region
      %118 = dma.done [#allocation6], 32
    $region61: #{tpu_custom_call.1} parent=1 // pred_fallthru
      _
    // Predicated region
    $region62: #{tpu_custom_call.1} parent=1 // pred_check
      _
    $region63: #{tpu_custom_call.1} parent=1 // pred_check_branch
      %120 = sbr.rel (0) target = $region65
    $region64: #{tpu_custom_call.1} parent=1 // pred_region
      %121 = dma.done [#allocation6], 16
    $region65: #{tpu_custom_call.1} parent=1 // pred_fallthru
      _
    // Predicated region
    $region66: #{tpu_custom_call.1} parent=1 // pred_check
      _
    $region67: #{tpu_custom_call.1} parent=1 // pred_check_branch
      %123 = sbr.rel (0) target = $region69
    $region68: #{tpu_custom_call.1} parent=1 // pred_region
      %124 = dma.done [#allocation9], 16
    $region69: #{tpu_custom_call.1} parent=1 // pred_fallthru
      _
    // Predicated region
    $region70: #{tpu_custom_call.1} parent=1 // pred_check
      _
    $region71: #{tpu_custom_call.1} parent=1 // pred_check_branch
      %126 = sbr.rel (0) target = $region73
    $region72: #{tpu_custom_call.1} parent=1 // pred_region
      %127 = dma.done [#allocation9], 256
    $region73: #{tpu_custom_call.1} parent=1 // pred_fallthru
      _
    // Predicated region
    $region74: #{tpu_custom_call.1} parent=1 // pred_check
      _
    $region75: #{tpu_custom_call.1} parent=1 // pred_check_branch
      %129 = sbr.rel (0) target = $region77
    $region76: #{tpu_custom_call.1} parent=1 // pred_region
      %130 = dma.done [#allocation12], 256
    $region77: #{tpu_custom_call.1} parent=1 // pred_fallthru
      _
    // Predicated region
    $region78: #{tpu_custom_call.1} parent=1 // pred_check
      _
    $region79: #{tpu_custom_call.1} parent=1 // pred_check_branch
      %132 = sbr.rel (0) target = $region81
    $region80: #{tpu_custom_call.1} parent=1 // pred_region
      %133 = dma.done [#allocation12], 16
    $region81: #{tpu_custom_call.1} parent=1 // pred_fallthru
      _
    %v135 = vld [vmem:[%s0] sm:$0x3]
    %v136 = vld [vmem:[#allocation2] sm:$0x3]
    %v137 = vld [vmem:[#allocation5] sm:$0x3]
    %v138 = vld [vmem:[%s3] sm:$0xf]
    %v139 = vld [vmem:[%s3 + $0x4] sm:$0xf]
    %v140 = vpack.c.bf16 %v136, %v136
    %v141 = vld [vmem:[%s5] sm:$0xf]
    %v142 = vld [vmem:[%s5 + $0x4] sm:$0xf]
    %v143 = vld [vmem:[%s5 + $0x8] sm:$0xf]
    %v144 = vld [vmem:[%s5 + $0xc] sm:$0xf]
    %v149 = vunpack.c.l.b16 %v141
    %v150 = vunpack.c.l.b16 %v142
    %v151 = vunpack.c.l.b16 %v143
    %v152 = vunpack.c.l.b16 %v144
    %v153 = vpack.c.b16 %v150, %v149
    %v154 = vpack.c.b16 %v152, %v151
    %vm157 = vcmask 261120
    %v159 = vsel %vm157, %v140, 0
    %161 = vmatprep.subr.bf16.mxu0 0
    %162 = vmatpush1.bf16.msra.mxu0 %v153
    %163 = vmatprep.subr.bf16.mxu0 0
    %164 = vmatpush1.bf16.msra.mxu0 %v154
    %165 = vmatprep.subr.bf16.mxu0 0
    %166 = vmatpush1.bf16.msra.mxu0 0
    %167 = vmatprep.subr.bf16.mxu0 0
    %168 = vmatpush1.bf16.msra.mxu0 0
    %169 = vmatprep.subr.bf16.mxu0 0
    %170 = vmatpush1.bf16.msra.mxu0 0
    %171 = vmatprep.subr.bf16.mxu0 0
    %172 = vmatpush1.bf16.msra.mxu0 0
    %173 = vmatprep.subr.bf16.mxu0 0
    %174 = vmatpush1.bf16.msra.mxu0 0
    %175 = vmatprep.subr.bf16.mxu0 0
    %176 = vmatpush1.bf16.msra.mxu0 0
    %177 = vmatprep.subr.bf16.mxu0 0
    %178 = vmatpush1.bf16.msra.mxu0 0
    %179 = vmatprep.subr.bf16.mxu0 0
    %180 = vmatpush1.bf16.msra.mxu0 0
    %181 = vmatprep.subr.bf16.mxu0 0
    %182 = vmatpush1.bf16.msra.mxu0 0
    %183 = vmatprep.subr.bf16.mxu0 0
    %184 = vmatpush1.bf16.msra.mxu0 0
    %185 = vmatprep.subr.bf16.mxu0 0
    %186 = vmatpush1.bf16.msra.mxu0 0
    %187 = vmatprep.subr.bf16.mxu0 0
    %188 = vmatpush1.bf16.msra.mxu0 0
    %189 = vmatprep.subr.bf16.mxu0 0
    %190 = vmatpush1.bf16.msra.mxu0 0
    %191 = vmatprep.subr.bf16.mxu0 0
    %192 = vmatpush1.bf16.msra.mxu0 0
    %193 = vmatprep.mubr.bf16.mxu0 0
    %194 = vmatmul.mubr.bf16.gmra.mrb[0].mxu0 %v159
    %v195 = vpop.f32.mrb[0].mxu0
    %v196 = vadd.f32 0.0, %v195
    %v197 = vpop.f32.mrb[0].mxu0
    %v198 = vpop.f32.mrb[0].mxu0
    %v199 = vpop.f32.mrb[0].mxu0
    %200 = vdwg.mxu0
    %v201 = vld [vmem:[%s6] sm:$0xf]
    %v202 = vld [vmem:[%s6 + $0x4] sm:$0xf]
    %v203 = vld [vmem:[%s6 + $0x8] sm:$0xf]
    %v204 = vld [vmem:[%s6 + $0xc] sm:$0xf]
    %v205 = vld [vmem:[%s6 + $0x10] sm:$0xf]
    %v206 = vld [vmem:[%s6 + $0x14] sm:$0xf]
    %v207 = vld [vmem:[%s6 + $0x18] sm:$0xf]
    %v208 = vld [vmem:[%s6 + $0x1c] sm:$0xf]
    %v211 = vunpack.c.l.b16 %v138
    %v212 = vunpack.c.l.b16 %v139
    %v213 = vpack.c.b16 %v212, %v211
    %v222 = vunpack.c.l.b16 %v201
    %v223 = vunpack.c.l.b16 %v202
    %v224 = vunpack.c.l.b16 %v203
    %v225 = vunpack.c.l.b16 %v204
    %v226 = vunpack.c.l.b16 %v205
    %v227 = vunpack.c.l.b16 %v206
    %v228 = vunpack.c.l.b16 %v207
    %v229 = vunpack.c.l.b16 %v208
    %v230 = vpack.c.b16 %v223, %v222
    %v231 = vpack.c.b16 %v225, %v224
    %v232 = vpack.c.b16 %v227, %v226
    %v233 = vpack.c.b16 %v229, %v228
    %vm238 = vcmask 523264
    %v240 = vsel %vm238, %v213, 0
    %242 = vmatprep.subr.bf16.mxu0 0
    %243 = vmatpush1.bf16.msra.mxu0 %v230
    %244 = vmatprep.subr.bf16.mxu0 0
    %245 = vmatpush1.bf16.msra.mxu0 %v231
    %246 = vmatprep.subr.bf16.mxu0 0
    %247 = vmatpush1.bf16.msra.mxu0 %v232
    %248 = vmatprep.subr.bf16.mxu0 0
    %249 = vmatpush1.bf16.msra.mxu0 %v233
    %250 = vmatprep.subr.bf16.mxu0 0
    %251 = vmatpush1.bf16.msra.mxu0 0
    %252 = vmatprep.subr.bf16.mxu0 0
    %253 = vmatpush1.bf16.msra.mxu0 0
    %254 = vmatprep.subr.bf16.mxu0 0
    %255 = vmatpush1.bf16.msra.mxu0 0
    %256 = vmatprep.subr.bf16.mxu0 0
    %257 = vmatpush1.bf16.msra.mxu0 0
    %258 = vmatprep.subr.bf16.mxu0 0
    %259 = vmatpush1.bf16.msra.mxu0 0
    %260 = vmatprep.subr.bf16.mxu0 0
    %261 = vmatpush1.bf16.msra.mxu0 0
    %262 = vmatprep.subr.bf16.mxu0 0
    %263 = vmatpush1.bf16.msra.mxu0 0
    %264 = vmatprep.subr.bf16.mxu0 0
    %265 = vmatpush1.bf16.msra.mxu0 0
    %266 = vmatprep.subr.bf16.mxu0 0
    %267 = vmatpush1.bf16.msra.mxu0 0
    %268 = vmatprep.subr.bf16.mxu0 0
    %269 = vmatpush1.bf16.msra.mxu0 0
    %270 = vmatprep.subr.bf16.mxu0 0
    %271 = vmatpush1.bf16.msra.mxu0 0
    %272 = vmatprep.subr.bf16.mxu0 0
    %273 = vmatpush1.bf16.msra.mxu0 0
    %274 = vmatprep.mubr.bf16.mxu0 0
    %275 = vmatmul.mubr.bf16.gmra.mrb[0].mxu0 %v240
    %v276 = vpop.f32.mrb[0].mxu0
    %v277 = vadd.f32 0.0, %v276
    %v278 = vpop.f32.mrb[0].mxu0
    %v279 = vpop.f32.mrb[0].mxu0
    %v280 = vadd.f32 0.0, %v279
    %v281 = vpop.f32.mrb[0].mxu0
    %282 = vdwg.mxu0
    %v285 = vunpack.c.l.s4 1966171168
    %v286 = vunpack.c.0.s8 %v285
    %v287 = vlaneseq
    %v288 = vshrl.u32 %v287, 7
    %v289 = vsub.s32 %v286, %v288
    %v290 = vrot.slane %v196, %v289
    %v291 = vcombine.high %v290, %v290
    %v293 = vunpack.c.l.s4 1966171168
    %v294 = vunpack.c.0.s8 %v293
    %v295 = vlaneseq
    %v296 = vshrl.u32 %v295, 7
    %v297 = vsub.s32 %v294, %v296
    %v298 = vrot.slane %v290, %v297
    %v300 = vunpack.c.l.s4 1966171168
    %v301 = vunpack.c.0.s8 %v300
    %v302 = vlaneseq
    %v303 = vshrl.u32 %v302, 7
    %v304 = vsub.s32 %v301, %v303
    %v305 = vrot.slane %v291, %v304
    %v306 = vlaneseq
    %v307 = vshrl.u32 %v306, 7
    %v308 = vsub.s32 0, %v307
    %v309 = vrot.slane %v298, %v308
    %v310 = vlaneseq
    %v311 = vshrl.u32 %v310, 7
    %v312 = vsub.s32 0, %v311
    %v313 = vrot.slane %v305, %v312
    %v316 = vadd.f32 %v309, %v277
    %v317 = vadd.f32 %v313, %v280
    %v318 = vld [vmem:[#allocation7] sm:$0x1]
    %v320 = vlaneseq
    %v321 = vshrl.u32 %v320, 7
    %v322 = vsub.s32 0, %v321
    %v323 = vrot.slane %v318, %v322
    %v325 = vadd.f32 %v316, %v323
    %v326 = vadd.f32 %v317, %v323
    %v327 = vtanh.pop %v325
    %v328 = vtanh.pop %v326
    %v329 = vld [vmem:[#allocation8] sm:$0x1]
    %v331 = vlaneseq
    %v332 = vshrl.u32 %v331, 7
    %v333 = vsub.s32 0, %v332
    %v334 = vrot.slane %v329, %v333
    %v336 = vmul.f32 %v327, %v334
    %v337 = vmul.f32 %v328, %v334
    %v338 = vsel %vm157, %v336, 0.0
    %339 = vadd.xlane.f32.xlu0 %v338
    %v340 = vpop.xlane.xlu0 %339
    %v341 = vsel %vm157, %v337, 0.0
    %342 = vadd.xlane.f32.xlu0 %v341
    %v343 = vpop.xlane.xlu0 %342
    %v344 = vld [vmem:[%s4] sm:$0x3]
    %v346 = vlaneseq
    %v347 = vshrl.u32 %v346, 7
    %v348 = vsub.s32 0, %v347
    %v349 = vrot.slane %v344, %v348
    %351 = vbcast.lane.b32.xlu0 %v349, 256
    %v352 = vpop.permute.xlu0 %351
    %v353 = vlaneseq
    %v354 = vshrl.u32 %v353, 7
    %v355 = vsub.s32 1, %v354
    %v356 = vrot.slane %v344, %v355
    %358 = vbcast.lane.b32.xlu0 %v356, 256
    %v359 = vpop.permute.xlu0 %358
    %v362 = vadd.f32 %v340, %v352
    %v363 = vadd.f32 %v343, %v359
    %366 = vset.pattern.permute.xlu0 0
    %367 = vperm.xlu0 %366, %v362
    %v368 = vpop.permute.xlu0 %367
    %369 = vset.pattern.permute.xlu0 0
    %370 = vperm.xlu0 %369, %v363
    %v371 = vpop.permute.xlu0 %370
    %v372 = vlaneseq
    %v373 = vand.u32 %v372, 127
    %v374 = vlaneseq
    %v375 = vshrl.u32 %v374, 7
    %v376 = vsub.s32 %v373, %v375
    %v377 = vrot.slane %v368, %v376
    %v378 = vlaneseq
    %v379 = vshrl.u32 %v378, 7
    %v380 = vsub.s32 %v373, %v379
    %v381 = vrot.slane %v371, %v380
    %vm382 = vcmask 1041409
    %v383 = vsel %vm382, %v381, %v377
    %vm385 = vcmask 58368
    %v386 = vsel %vm385, %v383, -inf
    %387 = vmax.xlane.f32.xlu0 %v386
    %v388 = vpop.xlane.xlu0 %387
    %v390 = vlaneseq
    %v391 = vshrl.u32 %v390, 7
    %v392 = vsub.s32 0, %v391
    %v393 = vrot.slane %v388, %v392
    %v394 = vlaneseq
    %v395 = vshrl.u32 %v394, 7
    %v396 = vsub.s32 1, %v395
    %v397 = vrot.slane %v388, %v396
    %v400 = vsub.f32 %v362, %v393
    %v401 = vsub.f32 %v363, %v397
    %v402 = vmul.f32 %v400, 1.442695
    %v403 = vpow.pop %v402
    %v404 = vmul.f32 %v401, 1.442695
    %v405 = vpow.pop %v404
    %408 = vset.pattern.permute.xlu0 0
    %409 = vperm.xlu0 %408, %v403
    %v410 = vpop.permute.xlu0 %409
    %411 = vset.pattern.permute.xlu0 0
    %412 = vperm.xlu0 %411, %v405
    %v413 = vpop.permute.xlu0 %412
    %v414 = vlaneseq
    %v415 = vshrl.u32 %v414, 7
    %v416 = vsub.s32 %v373, %v415
    %v417 = vrot.slane %v410, %v416
    %v418 = vlaneseq
    %v419 = vshrl.u32 %v418, 7
    %v420 = vsub.s32 %v373, %v419
    %v421 = vrot.slane %v413, %v420
    %v422 = vsel %vm382, %v421, %v417
    %v424 = vsel %vm385, %v422, 0.0
    %425 = vadd.xlane.f32.xlu0 %v424
    %v426 = vpop.xlane.xlu0 %425
    %v427 = vrcp.pop %v426
    %v429 = vlaneseq
    %v430 = vshrl.u32 %v429, 7
    %v431 = vsub.s32 0, %v430
    %v432 = vrot.slane %v427, %v431
    %v433 = vlaneseq
    %v434 = vshrl.u32 %v433, 7
    %v435 = vsub.s32 1, %v434
    %v436 = vrot.slane %v427, %v435
    %v439 = vmul.f32 %v403, %v432
    %v440 = vmul.f32 %v405, %v436
    %v441 = vunpack.c.l.bf16 %v138
    %v442 = vunpack.c.l.bf16 %v139
    %444 = vset.pattern.permute.xlu0 0
    %445 = vperm.xlu0 %444, %v439
    %v446 = vpop.permute.xlu0 %445
    %449 = vset.pattern.permute.xlu0 0
    %450 = vperm.xlu0 %449, %v440
    %v451 = vpop.permute.xlu0 %450
    %v453 = vmul.f32 %v446, %v441
    %v454 = vmul.f32 %v451, %v442
    %v455 = vsel %vm238, %v453, 0.0
    %v456 = vrot.slane %v455, 4
    %v457 = vadd.f32 %v455, %v456
    %v458 = vrot.slane %v457, 2
    %v459 = vadd.f32 %v457, %v458
    %v460 = vrot.slane %v459, 1
    %v461 = vadd.f32 %v459, %v460
    %v462 = vsel %vm238, %v454, 0.0
    %v463 = vrot.slane %v462, 4
    %v464 = vadd.f32 %v462, %v463
    %v465 = vrot.slane %v464, 2
    %v466 = vadd.f32 %v464, %v465
    %v467 = vrot.slane %v466, 1
    %v468 = vadd.f32 %v466, %v467
    %v469 = vpack.c.bf16 %v135, %v135
    %v470 = vld [vmem:[#allocation10] sm:$0xf]
    %v471 = vld [vmem:[#allocation10 + $0x4] sm:$0xf]
    %v472 = vld [vmem:[#allocation10 + $0x8] sm:$0xf]
    %v473 = vld [vmem:[#allocation10 + $0xc] sm:$0xf]
    %v474 = vpack.c.bf16 %v461, %v461
    %v475 = vpack.c.bf16 %v468, %v468
    %v476 = vld [vmem:[%s10] sm:$0xf]
    %v477 = vld [vmem:[%s10 + $0x4] sm:$0xf]
    %v478 = vld [vmem:[%s10 + $0x8] sm:$0xf]
    %v479 = vld [vmem:[%s10 + $0xc] sm:$0xf]
    %v480 = vld [vmem:[%s10 + $0x10] sm:$0xf]
    %v481 = vld [vmem:[%s10 + $0x14] sm:$0xf]
    %v482 = vld [vmem:[%s10 + $0x18] sm:$0xf]
    %v483 = vld [vmem:[%s10 + $0x1c] sm:$0xf]
    %v486 = vunpack.c.l.b16 %v474
    %v487 = vunpack.c.l.b16 %v475
    %v488 = vsel %vm382, %v487, %v486
    %v489 = vpack.c.b16 %v488, %v488
    %v498 = vunpack.c.l.b16 %v476
    %v499 = vunpack.c.l.b16 %v477
    %v500 = vunpack.c.l.b16 %v478
    %v501 = vunpack.c.l.b16 %v479
    %v502 = vunpack.c.l.b16 %v480
    %v503 = vunpack.c.l.b16 %v481
    %v504 = vunpack.c.l.b16 %v482
    %v505 = vunpack.c.l.b16 %v483
    %v506 = vpack.c.b16 %v499, %v498
    %v507 = vpack.c.b16 %v501, %v500
    %v508 = vpack.c.b16 %v503, %v502
    %v509 = vpack.c.b16 %v505, %v504
    %v515 = vsel %vm238, %v489, 0
    %517 = vmatprep.subr.bf16.mxu0 0
    %518 = vmatpush1.bf16.msra.mxu0 %v506
    %519 = vmatprep.subr.bf16.mxu0 0
    %520 = vmatpush1.bf16.msra.mxu0 %v507
    %521 = vmatprep.subr.bf16.mxu0 0
    %522 = vmatpush1.bf16.msra.mxu0 %v508
    %523 = vmatprep.subr.bf16.mxu0 0
    %524 = vmatpush1.bf16.msra.mxu0 %v509
    %525 = vmatprep.subr.bf16.mxu0 0
    %526 = vmatpush1.bf16.msra.mxu0 0
    %527 = vmatprep.subr.bf16.mxu0 0
    %528 = vmatpush1.bf16.msra.mxu0 0
    %529 = vmatprep.subr.bf16.mxu0 0
    %530 = vmatpush1.bf16.msra.mxu0 0
    %531 = vmatprep.subr.bf16.mxu0 0
    %532 = vmatpush1.bf16.msra.mxu0 0
    %533 = vmatprep.subr.bf16.mxu0 0
    %534 = vmatpush1.bf16.msra.mxu0 0
    %535 = vmatprep.subr.bf16.mxu0 0
    %536 = vmatpush1.bf16.msra.mxu0 0
    %537 = vmatprep.subr.bf16.mxu0 0
    %538 = vmatpush1.bf16.msra.mxu0 0
    %539 = vmatprep.subr.bf16.mxu0 0
    %540 = vmatpush1.bf16.msra.mxu0 0
    %541 = vmatprep.subr.bf16.mxu0 0
    %542 = vmatpush1.bf16.msra.mxu0 0
    %543 = vmatprep.subr.bf16.mxu0 0
    %544 = vmatpush1.bf16.msra.mxu0 0
    %545 = vmatprep.subr.bf16.mxu0 0
    %546 = vmatpush1.bf16.msra.mxu0 0
    %547 = vmatprep.subr.bf16.mxu0 0
    %548 = vmatpush1.bf16.msra.mxu0 0
    %549 = vmatprep.mubr.bf16.mxu0 0
    %550 = vmatmul.mubr.bf16.gmra.mrb[0].mxu0 %v515
    %v551 = vpop.f32.mrb[0].mxu0
    %v552 = vadd.f32 0.0, %v551
    %v553 = vpop.f32.mrb[0].mxu0
    %v554 = vpop.f32.mrb[0].mxu0
    %v555 = vpop.f32.mrb[0].mxu0
    %556 = vdwg.mxu0
    %v561 = vunpack.c.l.b16 %v470
    %v562 = vunpack.c.l.b16 %v471
    %v563 = vunpack.c.l.b16 %v472
    %v564 = vunpack.c.l.b16 %v473
    %v565 = vpack.c.b16 %v562, %v561
    %v566 = vpack.c.b16 %v564, %v563
    %v570 = vsel %vm157, %v469, 0
    %572 = vmatprep.subr.bf16.mxu0 0
    %573 = vmatpush1.bf16.msra.mxu0 %v565
    %574 = vmatprep.subr.bf16.mxu0 0
    %575 = vmatpush1.bf16.msra.mxu0 %v566
    %576 = vmatprep.subr.bf16.mxu0 0
    %577 = vmatpush1.bf16.msra.mxu0 0
    %578 = vmatprep.subr.bf16.mxu0 0
    %579 = vmatpush1.bf16.msra.mxu0 0
    %580 = vmatprep.subr.bf16.mxu0 0
    %581 = vmatpush1.bf16.msra.mxu0 0
    %582 = vmatprep.subr.bf16.mxu0 0
    %583 = vmatpush1.bf16.msra.mxu0 0
    %584 = vmatprep.subr.bf16.mxu0 0
    %585 = vmatpush1.bf16.msra.mxu0 0
    %586 = vmatprep.subr.bf16.mxu0 0
    %587 = vmatpush1.bf16.msra.mxu0 0
    %588 = vmatprep.subr.bf16.mxu0 0
    %589 = vmatpush1.bf16.msra.mxu0 0
    %590 = vmatprep.subr.bf16.mxu0 0
    %591 = vmatpush1.bf16.msra.mxu0 0
    %592 = vmatprep.subr.bf16.mxu0 0
    %593 = vmatpush1.bf16.msra.mxu0 0
    %594 = vmatprep.subr.bf16.mxu0 0
    %595 = vmatpush1.bf16.msra.mxu0 0
    %596 = vmatprep.subr.bf16.mxu0 0
    %597 = vmatpush1.bf16.msra.mxu0 0
    %598 = vmatprep.subr.bf16.mxu0 0
    %599 = vmatpush1.bf16.msra.mxu0 0
    %600 = vmatprep.subr.bf16.mxu0 0
    %601 = vmatpush1.bf16.msra.mxu0 0
    %602 = vmatprep.subr.bf16.mxu0 0
    %603 = vmatpush1.bf16.msra.mxu0 0
    %604 = vmatprep.mubr.bf16.mxu0 0
    %605 = vmatmul.mubr.bf16.gmra.mrb[0].mxu0 %v570
    %v606 = vpop.f32.mrb[0].mxu0
    %v607 = vadd.f32 %v552, %v606
    %v608 = vpop.f32.mrb[0].mxu0
    %v609 = vpop.f32.mrb[0].mxu0
    %v610 = vpop.f32.mrb[0].mxu0
    %611 = vdwg.mxu0
    %v612 = vld [vmem:[#allocation11] sm:$0xf]
    %v613 = vld [vmem:[#allocation11 + $0x4] sm:$0xf]
    %v614 = vld [vmem:[#allocation11 + $0x8] sm:$0xf]
    %v615 = vld [vmem:[#allocation11 + $0xc] sm:$0xf]
    %v620 = vunpack.c.l.b16 %v612
    %v621 = vunpack.c.l.b16 %v613
    %v622 = vunpack.c.l.b16 %v614
    %v623 = vunpack.c.l.b16 %v615
    %v624 = vpack.c.b16 %v621, %v620
    %v625 = vpack.c.b16 %v623, %v622
    %628 = vmatprep.subr.bf16.mxu0 0
    %629 = vmatpush1.bf16.msra.mxu0 %v624
    %630 = vmatprep.subr.bf16.mxu0 0
    %631 = vmatpush1.bf16.msra.mxu0 %v625
    %632 = vmatprep.subr.bf16.mxu0 0
    %633 = vmatpush1.bf16.msra.mxu0 0
    %634 = vmatprep.subr.bf16.mxu0 0
    %635 = vmatpush1.bf16.msra.mxu0 0
    %636 = vmatprep.subr.bf16.mxu0 0
    %637 = vmatpush1.bf16.msra.mxu0 0
    %638 = vmatprep.subr.bf16.mxu0 0
    %639 = vmatpush1.bf16.msra.mxu0 0
    %640 = vmatprep.subr.bf16.mxu0 0
    %641 = vmatpush1.bf16.msra.mxu0 0
    %642 = vmatprep.subr.bf16.mxu0 0
    %643 = vmatpush1.bf16.msra.mxu0 0
    %644 = vmatprep.subr.bf16.mxu0 0
    %645 = vmatpush1.bf16.msra.mxu0 0
    %646 = vmatprep.subr.bf16.mxu0 0
    %647 = vmatpush1.bf16.msra.mxu0 0
    %648 = vmatprep.subr.bf16.mxu0 0
    %649 = vmatpush1.bf16.msra.mxu0 0
    %650 = vmatprep.subr.bf16.mxu0 0
    %651 = vmatpush1.bf16.msra.mxu0 0
    %652 = vmatprep.subr.bf16.mxu0 0
    %653 = vmatpush1.bf16.msra.mxu0 0
    %654 = vmatprep.subr.bf16.mxu0 0
    %655 = vmatpush1.bf16.msra.mxu0 0
    %656 = vmatprep.subr.bf16.mxu0 0
    %657 = vmatpush1.bf16.msra.mxu0 0
    %658 = vmatprep.subr.bf16.mxu0 0
    %659 = vmatpush1.bf16.msra.mxu0 0
    %660 = vmatprep.mubr.bf16.mxu0 0
    %661 = vmatmul.mubr.bf16.gmra.mrb[0].mxu0 %v159
    %v662 = vpop.f32.mrb[0].mxu0
    %v663 = vadd.f32 0.0, %v662
    %v664 = vpop.f32.mrb[0].mxu0
    %v665 = vpop.f32.mrb[0].mxu0
    %v666 = vpop.f32.mrb[0].mxu0
    %667 = vdwg.mxu0
    %v668 = vadd.f32 %v607, %v663
    %v669 = vld [vmem:[#allocation13] sm:$0x1]
    %v671 = vlaneseq
    %v672 = vshrl.u32 %v671, 7
    %v673 = vsub.s32 0, %v672
    %v674 = vrot.slane %v669, %v673
    %v676 = vadd.f32 %v668, %v674
    %v677 = vxor.u32 %v676, 2147483648
    %v678 = vmul.f32 %v677, 1.442695
    %v679 = vpow.pop %v678
    %v680 = vadd.f32 %v679, 1.0
    %v681 = vrcp.pop %v680
    %v682 = vmul.f32 1.0, %v681
    %v683 = vtanh.pop %v676
    %685 = vrot.lane.b32.xlu0 %v137, 32
    %v686 = vpop.permute.xlu0 %685
    %v688 = vmul.f32 %v682, %v686
    %690 = vrot.lane.b32.xlu0 %v683, 64
    %v691 = vpop.permute.xlu0 %690
    %v693 = vmul.f32 %v682, %v691
    %695 = vrot.lane.b32.xlu0 %v693, 32
    %v696 = vpop.permute.xlu0 %695
    %v698 = vadd.f32 %v688, %v696
    %v699 = vtanh.pop %v698
    %701 = vrot.lane.b32.xlu0 %v699, 64
    %v702 = vpop.permute.xlu0 %701
    %v704 = vmul.f32 %v682, %v702
    %706 = vrot.lane.b32.xlu0 %v704, 32
    %v707 = vpop.permute.xlu0 %706
    %vm709 = vcmask 254976
    %710 = vst.msk [vmem:[#allocation14] sm:$0x3] %vm709, %v707
    %712 = vrot.lane.b32.xlu0 %v698, 96
    %v713 = vpop.permute.xlu0 %712
    %715 = vst.msk [vmem:[#allocation15] sm:$0x3] %vm709, %v713
    %v718 = vsel %vm382, %v468, %v461
    %719 = vrot.lane.b32.xlu0 %v718, 32
    %v720 = vpop.permute.xlu0 %719
    %723 = vrot.lane.b32.xlu0 %v135, 96
    %v724 = vpop.permute.xlu0 %723
    %v726 = vsel %vm157, %v707, %v720
    %vm727 = vcmask 785408
    %v728 = vsel %vm727, %v726, %v724
    %v729 = vpack.c.bf16 %v728, %v728
    %730 = vst [vmem:[#allocation17] sm:$0x1] %v729
    // Predicated region
    $region82: #{tpu_custom_call.1} parent=1 // pred_check
      _
    $region83: #{tpu_custom_call.1} parent=1 // pred_check_branch
      %732 = sbr.rel (0) target = $region85
    $region84: #{tpu_custom_call.1} parent=1 // pred_region
      %s734 = ssub.s32 32, 32
      %735 = vsyncadd [#allocation4], %s734
      %s737 = sshll.u32 [#allocation14], 4
      %s738 = int_to_ptr.vmem [resolvable:$true] %s737
      %740 = dma.vmem_to_hbm [thread:$0]  %s738, 32, %s13, [#allocation4]
    $region85: #{tpu_custom_call.1} parent=1 // pred_fallthru
      _
    // Predicated region
    $region86: #{tpu_custom_call.1} parent=1 // pred_check
      _
    $region87: #{tpu_custom_call.1} parent=1 // pred_check_branch
      %742 = sbr.rel (0) target = $region89
    $region88: #{tpu_custom_call.1} parent=1 // pred_region
      %s744 = ssub.s32 32, 32
      %745 = vsyncadd [#allocation16], %s744
      %s747 = sshll.u32 [#allocation15], 4
      %s748 = int_to_ptr.vmem [resolvable:$true] %s747
      %750 = dma.vmem_to_hbm [thread:$0]  %s748, 32, %s14, [#allocation16]
    $region89: #{tpu_custom_call.1} parent=1 // pred_fallthru
      _
    // Predicated region
    $region90: #{tpu_custom_call.1} parent=1 // pred_check
      _
    $region91: #{tpu_custom_call.1} parent=1 // pred_check_branch
      %752 = sbr.rel (0) target = $region93
    $region92: #{tpu_custom_call.1} parent=1 // pred_region
      %s754 = ssub.s32 16, 16
      %755 = vsyncadd [#allocation16], %s754
      %s757 = sshll.u32 [#allocation17], 4
      %s758 = int_to_ptr.vmem [resolvable:$true] %s757
      %760 = dma.vmem_to_hbm [thread:$0]  %s758, 16, %s15, [#allocation16]
    $region93: #{tpu_custom_call.1} parent=1 // pred_fallthru
      _
    // Predicated region
    $region94: #{tpu_custom_call.1} parent=1 // pred_check
      _
    $region95: #{tpu_custom_call.1} parent=1 // pred_check_branch
      %762 = sbr.rel (0) target = $region97
    $region96: #{tpu_custom_call.1} parent=1 // pred_region
      %763 = dma.done [#allocation4], 32
    $region97: #{tpu_custom_call.1} parent=1 // pred_fallthru
      _
    // Predicated region
    $region98: #{tpu_custom_call.1} parent=1 // pred_check
      _
    $region99: #{tpu_custom_call.1} parent=1 // pred_check_branch
      %765 = sbr.rel (0) target = $region101
    $region100: #{tpu_custom_call.1} parent=1 // pred_region
      %766 = dma.done [#allocation16], 32
    $region101: #{tpu_custom_call.1} parent=1 // pred_fallthru
      _
    // Predicated region
    $region102: #{tpu_custom_call.1} parent=1 // pred_check
      _
    $region103: #{tpu_custom_call.1} parent=1 // pred_check_branch
      %768 = sbr.rel (0) target = $region105
    $region104: #{tpu_custom_call.1} parent=1 // pred_region
      %769 = dma.done [#allocation16], 16
    $region105: #{tpu_custom_call.1} parent=1 // pred_fallthru
      _
    %770 = vsyncpa [#allocation3], 1
    %771 = vsyncpa [#allocation6], 1
    %772 = vsyncpa [#allocation9], 1
    %773 = vsyncpa [#allocation12], 1
    %774 = vsyncpa [#allocation4], 1
    %775 = vsyncpa [#allocation16], 1

</llo_original>
